<compile_context>
chip_gen: v5e
topology: v5e:2x2
jax: 0.10.0
libtpu: 0.0.40
codegen_flags: <defaults>
</compile_context>

<pallas_src>
import jax
import jax.numpy as jnp
from jax import lax
from jax.experimental import pallas as pl
from jax.experimental.pallas import tpu as pltpu


def _deep_kernel_body(s_ref, x1_ref, x2_ref, w1_ref, b1_ref, w2_ref, b2_ref,
                      out_ref):
    B = x1_ref.shape[0]
    s = s_ref[0]

    # ---- stack the two branches in-kernel: one pass over (2B, D_in) ----
    x = jnp.concatenate([x1_ref[...], x2_ref[...]], axis=0)  # (2B, D_in)

    # layer1 + ReLU
    h = jnp.dot(x, w1_ref[...], preferred_element_type=jnp.float32)
    h = jnp.maximum(h + b1_ref[...], 0.0)
    # L2-normalize along feature dim, with the entanglement scalar folded into
    # the per-row normalization column (one VPU multiply instead of two).
    # No eps, to match the PyTorch reference exactly (norm==0 -> inf/NaN there too).
    h = h * (s * lax.rsqrt(jnp.sum(h * h, axis=1, keepdims=True)))

    # layer2 + ReLU
    e = jnp.dot(h, w2_ref[...], preferred_element_type=jnp.float32)
    e = jnp.maximum(e + b2_ref[...], 0.0)
    e = e * lax.rsqrt(jnp.sum(e * e, axis=1, keepdims=True))

    # Split stacked rows back into the two branches (static slices) and
    # contract their feature dims directly on the MXU (A @ B^T form).
    e1 = e[:B, :]
    e2 = e[B:, :]
    out_ref[...] = lax.dot_general(
        e1, e2,
        dimension_numbers=(((1,), (1,)), ((), ())),
        preferred_element_type=jnp.float32,
    )


def deep_kernel_forward_pairs(x1, x2, params):
    """Batched pair evaluation.

    x1, x2 : (P, B, D_in) -- P independent (x1, x2) pairs.
    params : dict with w1 (D_in,H), b1 (1,H), w2 (H,H), b2 (1,H), s (1,).
    Returns (P, B, B) Gram blocks.
    """
    P, B, D_in = x1.shape
    H = params["w1"].shape[1]

    smem = pl.BlockSpec(memory_space=pltpu.MemorySpace.SMEM)
    # Per-pair input / output blocks (pair axis squeezed out of the kernel view).
    x_spec = pl.BlockSpec((None, B, D_in), lambda p: (p, 0, 0))
    out_spec = pl.BlockSpec((None, B, B), lambda p: (p, 0, 0))
    # Weights / biases: constant index_map across the pair grid -> stay
    # resident in VMEM (no re-DMA per pair).
    w1_spec = pl.BlockSpec((D_in, H), lambda p: (0, 0))
    b1_spec = pl.BlockSpec((1, H), lambda p: (0, 0))
    w2_spec = pl.BlockSpec((H, H), lambda p: (0, 0))
    b2_spec = pl.BlockSpec((1, H), lambda p: (0, 0))

    return pl.pallas_call(
        _deep_kernel_body,
        out_shape=jax.ShapeDtypeStruct((P, B, B), jnp.float32),
        grid=(P,),
        in_specs=[smem, x_spec, x_spec, w1_spec, b1_spec, w2_spec, b2_spec],
        out_specs=out_spec,
        compiler_params=pltpu.CompilerParams(
            dimension_semantics=("parallel",)),
    )(params["s"], x1, x2, params["w1"], params["b1"], params["w2"],
      params["b2"])


def deep_kernel_forward(x1, x2, params):
    """Single-pair forward: x1, x2 (B, D_in) -> (B, B)."""
    return deep_kernel_forward_pairs(x1[None], x2[None], params)[0]


def init_params(key, input_dim, hidden_dim):
    """Deterministic init mimicking nn.Linear's uniform(-1/sqrt(fan_in), ...)."""
    k1, k2, k3, k4 = jax.random.split(key, 4)
    lim1 = 1.0 / jnp.sqrt(jnp.float32(input_dim))
    lim2 = 1.0 / jnp.sqrt(jnp.float32(hidden_dim))
    # Stored pre-transposed: (in_features, out_features) so kernel does x @ W.
    w1 = jax.random.uniform(k1, (input_dim, hidden_dim), jnp.float32, -lim1, lim1)
    b1 = jax.random.uniform(k2, (1, hidden_dim), jnp.float32, -lim1, lim1)
    w2 = jax.random.uniform(k3, (hidden_dim, hidden_dim), jnp.float32, -lim2, lim2)
    b2 = jax.random.uniform(k4, (1, hidden_dim), jnp.float32, -lim2, lim2)
    s = jnp.ones((1,), jnp.float32)  # entanglement_strength
    return {"w1": w1, "b1": b1, "w2": w2, "b2": b2, "s": s}


def reference_forward(x1, x2, params):
    """Pure-JAX reference of DeepKernel.forward (sanity check)."""
    def branch(x):
        h = jnp.maximum(x @ params["w1"] + params["b1"], 0.0)
        h = h / jnp.linalg.norm(h, axis=1, keepdims=True)
        h = h * params["s"][0]
        e = jnp.maximum(h @ params["w2"] + params["b2"], 0.0)
        e = e / jnp.linalg.norm(e, axis=1, keepdims=True)
        return e
    return branch(x1) @ branch(x2).T


if __name__ == "__main__":
    # Small shapes consistent with the module: batch of 4 sentence embeddings,
    # embedding dim 32, hidden dim 128.
    B, D_IN, HIDDEN = 4, 32, 128

    key = jax.random.PRNGKey(0)
    kx1, kx2, kp = jax.random.split(key, 3)
    x1 = jax.random.normal(kx1, (B, D_IN), jnp.float32)
    x2 = jax.random.normal(kx2, (B, D_IN), jnp.float32)
    params = init_params(kp, D_IN, HIDDEN)

    # Single-pair forward (matches the PyTorch module's forward signature).
    out = deep_kernel_forward(x1, x2, params)
    out = jax.block_until_ready(out)
    ref = reference_forward(x1, x2, params)
    assert out.shape == (B, B)
    assert jnp.allclose(out, ref, atol=1e-5, rtol=1e-5)

    # Batched-pairs path: one gridded pallas_call, weights resident in VMEM.
    P = 4
    kx1p, kx2p = jax.random.split(jax.random.PRNGKey(1), 2)
    x1p = jax.random.normal(kx1p, (P, B, D_IN), jnp.float32)
    x2p = jax.random.normal(kx2p, (P, B, D_IN), jnp.float32)
    outp = jax.block_until_ready(deep_kernel_forward_pairs(x1p, x2p, params))
    refp = jnp.stack(
        [reference_forward(x1p[i], x2p[i], params) for i in range(P)])
    assert outp.shape == (P, B, B)
    assert jnp.allclose(outp, refp, atol=1e-5, rtol=1e-5)

    print("KERNEL_OK")
</pallas_src>

<mosaic_0001>
module attributes {stable_mosaic.version = 11 : i64} {
  func.func @_deep_kernel_body(%arg0: i32, %arg1: memref<1xf32, #tpu.memory_space<smem>>, %arg2: memref<1x4x32xf32, #tpu.memory_space<vmem>>, %arg3: memref<1x4x32xf32, #tpu.memory_space<vmem>>, %arg4: memref<32x128xf32, #tpu.memory_space<vmem>>, %arg5: memref<1x128xf32, #tpu.memory_space<vmem>>, %arg6: memref<128x128xf32, #tpu.memory_space<vmem>>, %arg7: memref<1x128xf32, #tpu.memory_space<vmem>>, %arg8: memref<1x4x4xf32, #tpu.memory_space<vmem>>) attributes {dimension_semantics = [#tpu.dimension_semantics<parallel>], iteration_bounds = array<i64: 1>, scalar_prefetch = 0 : i64, scratch_operands = 0 : i64, tpu.core_type = #tpu.core_type<tc>, window_params = [{transform_indices = @transform_0, window_bounds = array<i64: 1>}, {transform_indices = @transform_1, window_bounds = array<i64: 1, 4, 32>}, {transform_indices = @transform_2, window_bounds = array<i64: 1, 4, 32>}, {pipeline_mode = #tpu.pipeline_mode<synchronous>, transform_indices = @transform_3, window_bounds = array<i64: 32, 128>}, {pipeline_mode = #tpu.pipeline_mode<synchronous>, transform_indices = @transform_4, window_bounds = array<i64: 1, 128>}, {pipeline_mode = #tpu.pipeline_mode<synchronous>, transform_indices = @transform_5, window_bounds = array<i64: 128, 128>}, {pipeline_mode = #tpu.pipeline_mode<synchronous>, transform_indices = @transform_6, window_bounds = array<i64: 1, 128>}, {transform_indices = @transform_7, window_bounds = array<i64: 1, 4, 4>}]} {
    %c0 = arith.constant 0 : index
    %0 = memref.load %arg1[%c0] : memref<1xf32, #tpu.memory_space<smem>>
    %c0_0 = arith.constant 0 : index
    %c0_1 = arith.constant 0 : index
    %c0_2 = arith.constant 0 : index
    %1 = vector.load %arg2[%c0_0, %c0_1, %c0_2] : memref<1x4x32xf32, #tpu.memory_space<vmem>>, vector<1x4x32xf32>
    %2 = vector.shape_cast %1 : vector<1x4x32xf32> to vector<4x32xf32>
    %c0_3 = arith.constant 0 : index
    %c0_4 = arith.constant 0 : index
    %c0_5 = arith.constant 0 : index
    %3 = vector.load %arg3[%c0_3, %c0_4, %c0_5] : memref<1x4x32xf32, #tpu.memory_space<vmem>>, vector<1x4x32xf32>
    %4 = vector.shape_cast %3 : vector<1x4x32xf32> to vector<4x32xf32>
    %5 = tpu.concatenate %2, %4 in 0 : vector<4x32xf32>, vector<4x32xf32> -> vector<8x32xf32>
    %c0_6 = arith.constant 0 : index
    %c0_7 = arith.constant 0 : index
    %6 = vector.load %arg4[%c0_6, %c0_7] : memref<32x128xf32, #tpu.memory_space<vmem>>, vector<32x128xf32>
    %cst = arith.constant dense<0.000000e+00> : vector<8x128xf32>
    %7 = tpu.matmul %5, %6, %cst {dimension_numbers = #tpu.dot_dimension_numbers<[1], [0], [0], [1], [0, 0, 1, 1], [], []>} : vector<8x32xf32>, vector<32x128xf32>, vector<8x128xf32> -> vector<8x128xf32>
    %c0_8 = arith.constant 0 : index
    %c0_9 = arith.constant 0 : index
    %8 = vector.load %arg5[%c0_8, %c0_9] : memref<1x128xf32, #tpu.memory_space<vmem>>, vector<1x128xf32>
    %9 = vector.broadcast %8 : vector<1x128xf32> to vector<8x128xf32>
    %10 = arith.addf %7, %9 : vector<8x128xf32>
    %cst_10 = arith.constant 0.000000e+00 : f32
    %11 = vector.broadcast %cst_10 : f32 to vector<8x128xf32>
    %12 = arith.maximumf %10, %11 : vector<8x128xf32>
    %13 = arith.mulf %12, %12 : vector<8x128xf32>
    %cst_11 = arith.constant dense<0.000000e+00> : vector<8xf32>
    %14 = vector.multi_reduction <add>, %13, %cst_11 [1] : vector<8x128xf32> to vector<8xf32>
    %15 = vector.shape_cast %14 : vector<8xf32> to vector<8x1xf32>
    %16 = math.rsqrt %15 : vector<8x1xf32>
    %17 = vector.broadcast %0 : f32 to vector<8x1xf32>
    %18 = arith.mulf %17, %16 : vector<8x1xf32>
    %19 = vector.broadcast %18 : vector<8x1xf32> to vector<8x128xf32>
    %20 = arith.mulf %12, %19 : vector<8x128xf32>
    %c0_12 = arith.constant 0 : index
    %c0_13 = arith.constant 0 : index
    %21 = vector.load %arg6[%c0_12, %c0_13] : memref<128x128xf32, #tpu.memory_space<vmem>>, vector<128x128xf32>
    %cst_14 = arith.constant dense<0.000000e+00> : vector<8x128xf32>
    %22 = tpu.matmul %20, %21, %cst_14 {dimension_numbers = #tpu.dot_dimension_numbers<[1], [0], [0], [1], [0, 0, 1, 1], [], []>} : vector<8x128xf32>, vector<128x128xf32>, vector<8x128xf32> -> vector<8x128xf32>
    %c0_15 = arith.constant 0 : index
    %c0_16 = arith.constant 0 : index
    %23 = vector.load %arg7[%c0_15, %c0_16] : memref<1x128xf32, #tpu.memory_space<vmem>>, vector<1x128xf32>
    %24 = vector.broadcast %23 : vector<1x128xf32> to vector<8x128xf32>
    %25 = arith.addf %22, %24 : vector<8x128xf32>
    %cst_17 = arith.constant 0.000000e+00 : f32
    %26 = vector.broadcast %cst_17 : f32 to vector<8x128xf32>
    %27 = arith.maximumf %25, %26 : vector<8x128xf32>
    %28 = arith.mulf %27, %27 : vector<8x128xf32>
    %cst_18 = arith.constant dense<0.000000e+00> : vector<8xf32>
    %29 = vector.multi_reduction <add>, %28, %cst_18 [1] : vector<8x128xf32> to vector<8xf32>
    %30 = vector.shape_cast %29 : vector<8xf32> to vector<8x1xf32>
    %31 = math.rsqrt %30 : vector<8x1xf32>
    %32 = vector.broadcast %31 : vector<8x1xf32> to vector<8x128xf32>
    %33 = arith.mulf %27, %32 : vector<8x128xf32>
    %34 = vector.extract_strided_slice %33 {offsets = [0, 0], sizes = [4, 128], strides = [1, 1]} : vector<8x128xf32> to vector<4x128xf32>
    %35 = vector.extract_strided_slice %33 {offsets = [4, 0], sizes = [4, 128], strides = [1, 1]} : vector<8x128xf32> to vector<4x128xf32>
    %cst_19 = arith.constant dense<0.000000e+00> : vector<4x4xf32>
    %36 = tpu.matmul %34, %35, %cst_19 {dimension_numbers = #tpu.dot_dimension_numbers<[1], [1], [0], [0], [0, 0, 1, 0], [], []>} : vector<4x128xf32>, vector<4x128xf32>, vector<4x4xf32> -> vector<4x4xf32>
    %c0_20 = arith.constant 0 : index
    %c0_21 = arith.constant 0 : index
    %c0_22 = arith.constant 0 : index
    %37 = vector.load %arg8[%c0_20, %c0_21, %c0_22] : memref<1x4x4xf32, #tpu.memory_space<vmem>>, vector<1x4x4xf32>
    %38 = vector.shape_cast %37 : vector<1x4x4xf32> to vector<4x4xf32>
    %39 = vector.shape_cast %36 : vector<4x4xf32> to vector<1x4x4xf32>
    tpu.vector_store %arg8[%c0_20, %c0_21, %c0_22], %39 {strides = array<i32>} : memref<1x4x4xf32, #tpu.memory_space<vmem>>, vector<1x4x4xf32>,
    return
  }
  func.func @transform_0(%arg0: i32) -> i32 {
    %c0_i32 = arith.constant 0 : i32
    %c0_i32_0 = arith.constant 0 : i32
    return %c0_i32 : i32
  }
  func.func @transform_1(%arg0: i32) -> (i32, i32, i32) {
    %c0_i32 = arith.constant 0 : i32
    %c0_i32_0 = arith.constant 0 : i32
    %c0_i32_1 = arith.constant 0 : i32
    return %arg0, %c0_i32, %c0_i32_0 : i32, i32, i32
  }
  func.func @transform_2(%arg0: i32) -> (i32, i32, i32) {
    %c0_i32 = arith.constant 0 : i32
    %c0_i32_0 = arith.constant 0 : i32
    %c0_i32_1 = arith.constant 0 : i32
    return %arg0, %c0_i32, %c0_i32_0 : i32, i32, i32
  }
  func.func @transform_3(%arg0: i32) -> (i32, i32) {
    %c0_i32 = arith.constant 0 : i32
    %c0_i32_0 = arith.constant 0 : i32
    %c0_i32_1 = arith.constant 0 : i32
    return %c0_i32, %c0_i32_0 : i32, i32
  }
  func.func @transform_4(%arg0: i32) -> (i32, i32) {
    %c0_i32 = arith.constant 0 : i32
    %c0_i32_0 = arith.constant 0 : i32
    %c0_i32_1 = arith.constant 0 : i32
    return %c0_i32, %c0_i32_0 : i32, i32
  }
  func.func @transform_5(%arg0: i32) -> (i32, i32) {
    %c0_i32 = arith.constant 0 : i32
    %c0_i32_0 = arith.constant 0 : i32
    %c0_i32_1 = arith.constant 0 : i32
    return %c0_i32, %c0_i32_0 : i32, i32
  }
  func.func @transform_6(%arg0: i32) -> (i32, i32) {
    %c0_i32 = arith.constant 0 : i32
    %c0_i32_0 = arith.constant 0 : i32
    %c0_i32_1 = arith.constant 0 : i32
    return %c0_i32, %c0_i32_0 : i32, i32
  }
  func.func @transform_7(%arg0: i32) -> (i32, i32, i32) {
    %c0_i32 = arith.constant 0 : i32
    %c0_i32_0 = arith.constant 0 : i32
    %c0_i32_1 = arith.constant 0 : i32
    return %arg0, %c0_i32, %c0_i32_0 : i32, i32, i32
  }
}

</mosaic_0001>

<llo_original>
// kernel: tpu_custom_call.1
$region0: #{tpu_custom_call.1}
  #allocation0 [shape = 'u32[]', space=smem, size = 0x4, offset = 0x4, fixed_abs, tag = 'smem constant byte address 0x4 - core index']
  #allocation1 [shape = 'u32[72,128]{1,0:T(1,128)}', space=vmem, size = 0x9000, scoped, tag = 'internal scratch']
  #allocation2 [shape = 'f32[1]{0:T(128)S(6)}', space=smem, size = 0x200, scoped, tag = 'scoped memory for tpu_custom_call.1']
  %s0 = inlined_call_operand.<no memory space> [shape: f32[1], index: 0, kind: input, shape index: {}]
  %s1 = inlined_call_operand.hbm [shape: f32[1,4,32], index: 1, kind: input, shape index: {}]
  %s2 = inlined_call_operand.hbm [shape: f32[1,4,32], index: 2, kind: input, shape index: {}]
  %s3 = inlined_call_operand.hbm [shape: f32[32,128], index: 3, kind: input, shape index: {}]
  %s4 = inlined_call_operand.vmem [shape: f32[1,128], index: 4, kind: input, shape index: {}]
  %s5 = inlined_call_operand.hbm [shape: f32[128,128], index: 5, kind: input, shape index: {}]
  %s6 = inlined_call_operand.vmem [shape: f32[1,128], index: 6, kind: input, shape index: {}]
  %s7 = inlined_call_operand.hbm [shape: f32[1,4,4], index: 7, kind: output, shape index: {}]
  %s8 = sld [smem:[#allocation0]]
  $region54: #{tpu_custom_call.1} parent=0
    _
  %s10 = ssub.s32 1, %s8
  %s11 = scalar_select 0, %s10, %s8
  %12 = sst [smem:[#allocation2]] %s0
  $region1: #{tpu_custom_call.1} parent=0
    #allocation3 [shape = 'u8[2048]{0}', space=vmem, size = 0x800, scoped, tag = 'input window, operand 1, single buffered']
    #allocation4 [shape = 's32[1]{0}', space=sflag, size = 0x4, scoped, tag = 'scoped memory for tpu_custom_call.1']
    #allocation5 [shape = 's32[1]{0}', space=sflag, size = 0x4, scoped, tag = 'scoped memory for tpu_custom_call.1']
    #allocation6 [shape = 'u8[2048]{0}', space=vmem, size = 0x800, scoped, tag = 'input window, operand 2, single buffered']
    #allocation7 [shape = 's32[1]{0}', space=sflag, size = 0x4, scoped, tag = 'scoped memory for tpu_custom_call.1']
    #allocation8 [shape = 'u8[16384]{0}', space=vmem, size = 0x4000, scoped, tag = 'input window, operand 3, single buffered']
    #allocation9 [shape = 'u8[65536]{0}', space=vmem, size = 0x10000, scoped, tag = 'input window, operand 5, single buffered']
    #allocation10 [shape = 's32[1]{0}', space=sflag, size = 0x4, scoped, tag = 'scoped memory for tpu_custom_call.1']
    #allocation11 [shape = 'u8[2048]{0}', space=vmem, size = 0x800, scoped, tag = 'output window, operand 0, single buffered']
    %13 = vsyncpa [#allocation4], 0
    %14 = vsyncpa [#allocation7], 0
    %15 = vsyncpa [#allocation10], 0
    %16 = vsyncpa [#allocation5], 0
    // Predicated region
    $region2: #{tpu_custom_call.1} parent=1 // pred_check
      _
    $region3: #{tpu_custom_call.1} parent=1 // pred_check_branch
      %18 = sbr.rel (0) target = $region5
    $region4: #{tpu_custom_call.1} parent=1 // pred_region
      _
    $region5: #{tpu_custom_call.1} parent=1 // pred_fallthru
      _
    // Predicated region
    $region6: #{tpu_custom_call.1} parent=1 // pred_check
      _
    $region7: #{tpu_custom_call.1} parent=1 // pred_check_branch
      %20 = sbr.rel (0) target = $region9
    $region8: #{tpu_custom_call.1} parent=1 // pred_region
      %22 = vsyncadd [#allocation4], 0
      %s24 = sshll.u32 %s1, 4
      %s25 = int_to_ptr.hbm [resolvable:$true] %s24
      %s26 = sshll.u32 [#allocation3], 4
      %s27 = int_to_ptr.vmem [resolvable:$true] %s26
      %29 = dma.hbm_to_vmem [thread:$0]  %s25, 64, %s27, [#allocation4]
    $region9: #{tpu_custom_call.1} parent=1 // pred_fallthru
      _
    // Predicated region
    $region10: #{tpu_custom_call.1} parent=1 // pred_check
      _
    $region11: #{tpu_custom_call.1} parent=1 // pred_check_branch
      %31 = sbr.rel (0) target = $region13
    $region12: #{tpu_custom_call.1} parent=1 // pred_region
      %33 = vsyncadd [#allocation7], 0
      %s35 = sshll.u32 %s2, 4
      %s36 = int_to_ptr.hbm [resolvable:$true] %s35
      %s37 = sshll.u32 [#allocation6], 4
      %s38 = int_to_ptr.vmem [resolvable:$true] %s37
      %40 = dma.hbm_to_vmem [thread:$0]  %s36, 64, %s38, [#allocation7]
    $region13: #{tpu_custom_call.1} parent=1 // pred_fallthru
      _
    // Predicated region
    $region14: #{tpu_custom_call.1} parent=1 // pred_check
      _
    $region15: #{tpu_custom_call.1} parent=1 // pred_check_branch
      %42 = sbr.rel (0) target = $region17
    $region16: #{tpu_custom_call.1} parent=1 // pred_region
      %44 = vsyncadd [#allocation7], 0
      %s45 = sshll.u32 %s3, 4
      %s46 = int_to_ptr.hbm [resolvable:$true] %s45
      %s47 = sshll.u32 [#allocation8], 4
      %s48 = int_to_ptr.vmem [resolvable:$true] %s47
      %53 = dma.hbm_to_vmem [thread:$0]  %s46, 512, %s48, [#allocation7], 128, 128, 8
    $region17: #{tpu_custom_call.1} parent=1 // pred_fallthru
      _
    // Predicated region
    $region18: #{tpu_custom_call.1} parent=1 // pred_check
      _
    $region19: #{tpu_custom_call.1} parent=1 // pred_check_branch
      %55 = sbr.rel (0) target = $region21
    $region20: #{tpu_custom_call.1} parent=1 // pred_region
      _
    $region21: #{tpu_custom_call.1} parent=1 // pred_fallthru
      _
    // Predicated region
    $region22: #{tpu_custom_call.1} parent=1 // pred_check
      _
    $region23: #{tpu_custom_call.1} parent=1 // pred_check_branch
      %57 = sbr.rel (0) target = $region25
    $region24: #{tpu_custom_call.1} parent=1 // pred_region
      %59 = vsyncadd [#allocation10], 0
      %s60 = sshll.u32 %s5, 4
      %s61 = int_to_ptr.hbm [resolvable:$true] %s60
      %s62 = sshll.u32 [#allocation9], 4
      %s63 = int_to_ptr.vmem [resolvable:$true] %s62
      %68 = dma.hbm_to_vmem [thread:$0]  %s61, 2048, %s63, [#allocation10], 128, 128, 8
    $region25: #{tpu_custom_call.1} parent=1 // pred_fallthru
      _
    // Predicated region
    $region26: #{tpu_custom_call.1} parent=1 // pred_check
      _
    $region27: #{tpu_custom_call.1} parent=1 // pred_check_branch
      %70 = sbr.rel (0) target = $region29
    $region28: #{tpu_custom_call.1} parent=1 // pred_region
      _
    $region29: #{tpu_custom_call.1} parent=1 // pred_fallthru
      _
    // Predicated region
    $region30: #{tpu_custom_call.1} parent=1 // pred_check
      _
    $region31: #{tpu_custom_call.1} parent=1 // pred_check_branch
      %72 = sbr.rel (0) target = $region33
    $region32: #{tpu_custom_call.1} parent=1 // pred_region
      %74 = dma.done [#allocation4], 64
    $region33: #{tpu_custom_call.1} parent=1 // pred_fallthru
      _
    // Predicated region
    $region34: #{tpu_custom_call.1} parent=1 // pred_check
      _
    $region35: #{tpu_custom_call.1} parent=1 // pred_check_branch
      %76 = sbr.rel (0) target = $region37
    $region36: #{tpu_custom_call.1} parent=1 // pred_region
      %78 = dma.done [#allocation7], 64
    $region37: #{tpu_custom_call.1} parent=1 // pred_fallthru
      _
    // Predicated region
    $region38: #{tpu_custom_call.1} parent=1 // pred_check
      _
    $region39: #{tpu_custom_call.1} parent=1 // pred_check_branch
      %80 = sbr.rel (0) target = $region41
    $region40: #{tpu_custom_call.1} parent=1 // pred_region
      %82 = dma.done [#allocation7], 512
    $region41: #{tpu_custom_call.1} parent=1 // pred_fallthru
      _
    // Predicated region
    $region42: #{tpu_custom_call.1} parent=1 // pred_check
      _
    $region43: #{tpu_custom_call.1} parent=1 // pred_check_branch
      %84 = sbr.rel (0) target = $region45
    $region44: #{tpu_custom_call.1} parent=1 // pred_region
      %86 = dma.done [#allocation10], 2048
    $region45: #{tpu_custom_call.1} parent=1 // pred_fallthru
      _
    %s87 = sld [smem:[#allocation2]]
    %v88 = vld [vmem:[#allocation3] sm:$0xf]
    %v89 = vld [vmem:[#allocation6] sm:$0xf]
    %v91 = vrot.slane %v89, 4
    %vm93 = vcmask 1043456
    %v94 = vsel %vm93, %v88, %v91
    %v95 = vld [vmem:[#allocation8] sm:$0xff]
    %v96 = vld [vmem:[#allocation8 + $0x8] sm:$0xff]
    %v97 = vld [vmem:[#allocation8 + $0x10] sm:$0xff]
    %v98 = vld [vmem:[#allocation8 + $0x18] sm:$0xff]
    %v99 = vld [vmem:[%s4] sm:$0x1]
    %v101 = vperm.slane %v99, 0
    %vm103 = vcmask 261120
    %v105 = vsel %vm103, %v94, 0
    %107 = vmatpush.msra.mxu0 0.0
    %108 = vmatpush.msra.mxu0 0.0
    %109 = vmatpush.msra.mxu0 0.0
    %110 = vmatpush.msra.mxu0 0.0
    %111 = vmatpush.msra.mxu0 0.0
    %112 = vmatpush.msra.mxu0 0.0
    %113 = vmatpush.msra.mxu0 0.0
    %114 = vmatpush.msra.mxu0 0.0
    %115 = vmatpush.msra.mxu0 0.0
    %116 = vmatpush.msra.mxu0 0.0
    %117 = vmatpush.msra.mxu0 0.0
    %118 = vmatpush.msra.mxu0 0.0
    %119 = vmatpush.msra.mxu0 %v98
    %120 = vmatpush.msra.mxu0 %v97
    %121 = vmatpush.msra.mxu0 %v96
    %122 = vmatpush.msra.mxu0 %v95
    %123 = vmatmul.f32.gmra.mxu0 %v105
    %v124 = vpop.f32.mrf.mxu0
    %v125 = vadd.f32 %v101, %v124
    %126 = vdwg.mxu0
    %v127 = vmax.f32 %v125, 0.0
    %v128 = vmul.f32 %v127, %v127
    %129 = vadd.xlane.f32.xlu0 %v128
    %v130 = vpop.xlane.xlu0 %129
    %v131 = vrsqrt.pop %v130
    %v132 = vmul.f32 %v131, %v130
    %v133 = vmul.f32 %v132, %v131
    %v134 = vmul.f32 0.5, %v133
    %v135 = vsub.f32 1.5, %v134
    %v136 = vmul.f32 %v131, %v135
    %vm137 = vweird.f32 %v130
    %vm138 = vweird.f32 %v131
    %vm139 = vmor %vm137, %vm138
    %v140 = vsel %vm139, %v131, %v136
    %v141 = vstv %s87
    %v142 = vmul.f32 %v141, %v140
    %v143 = vmul.f32 %v127, %v142
    %v144 = vld [vmem:[#allocation9] sm:$0xff]
    %v145 = vld [vmem:[#allocation9 + $0x8] sm:$0xff]
    %v146 = vld [vmem:[#allocation9 + $0x10] sm:$0xff]
    %v147 = vld [vmem:[#allocation9 + $0x18] sm:$0xff]
    %v148 = vld [vmem:[#allocation9 + $0x20] sm:$0xff]
    %v149 = vld [vmem:[#allocation9 + $0x28] sm:$0xff]
    %v150 = vld [vmem:[#allocation9 + $0x30] sm:$0xff]
    %v151 = vld [vmem:[#allocation9 + $0x38] sm:$0xff]
    %v152 = vld [vmem:[#allocation9 + $0x40] sm:$0xff]
    %v153 = vld [vmem:[#allocation9 + $0x48] sm:$0xff]
    %v154 = vld [vmem:[#allocation9 + $0x50] sm:$0xff]
    %v155 = vld [vmem:[#allocation9 + $0x58] sm:$0xff]
    %v156 = vld [vmem:[#allocation9 + $0x60] sm:$0xff]
    %v157 = vld [vmem:[#allocation9 + $0x68] sm:$0xff]
    %v158 = vld [vmem:[#allocation9 + $0x70] sm:$0xff]
    %v159 = vld [vmem:[#allocation9 + $0x78] sm:$0xff]
    %v160 = vld [vmem:[%s6] sm:$0x1]
    %v162 = vperm.slane %v160, 0
    %164 = vmatpush.msra.mxu0 %v159
    %165 = vmatpush.msra.mxu0 %v158
    %166 = vmatpush.msra.mxu0 %v157
    %167 = vmatpush.msra.mxu0 %v156
    %168 = vmatpush.msra.mxu0 %v155
    %169 = vmatpush.msra.mxu0 %v154
    %170 = vmatpush.msra.mxu0 %v153
    %171 = vmatpush.msra.mxu0 %v152
    %172 = vmatpush.msra.mxu0 %v151
    %173 = vmatpush.msra.mxu0 %v150
    %174 = vmatpush.msra.mxu0 %v149
    %175 = vmatpush.msra.mxu0 %v148
    %176 = vmatpush.msra.mxu0 %v147
    %177 = vmatpush.msra.mxu0 %v146
    %178 = vmatpush.msra.mxu0 %v145
    %179 = vmatpush.msra.mxu0 %v144
    %180 = vmatmul.f32.gmra.mxu0 %v143
    %v181 = vpop.f32.mrf.mxu0
    %v182 = vadd.f32 %v162, %v181
    %183 = vdwg.mxu0
    %v184 = vmax.f32 %v182, 0.0
    %v185 = vmul.f32 %v184, %v184
    %186 = vadd.xlane.f32.xlu0 %v185
    %v187 = vpop.xlane.xlu0 %186
    %v188 = vrsqrt.pop %v187
    %v189 = vmul.f32 %v188, %v187
    %v190 = vmul.f32 %v189, %v188
    %v191 = vmul.f32 0.5, %v190
    %v192 = vsub.f32 1.5, %v191
    %v193 = vmul.f32 %v188, %v192
    %vm194 = vweird.f32 %v187
    %vm195 = vweird.f32 %v188
    %vm196 = vmor %vm194, %vm195
    %v197 = vsel %vm196, %v188, %v193
    %v198 = vmul.f32 %v184, %v197
    %v200 = vrot.slane %v198, 4
    %202 = vmatpush.xpose.msra.mxu0 0.0
    %203 = vmatpush.xpose.msra.mxu0 0.0
    %204 = vmatpush.xpose.msra.mxu0 0.0
    %205 = vmatpush.xpose.msra.mxu0 0.0
    %206 = vmatpush.xpose.msra.mxu0 0.0
    %207 = vmatpush.xpose.msra.mxu0 0.0
    %208 = vmatpush.xpose.msra.mxu0 0.0
    %209 = vmatpush.xpose.msra.mxu0 0.0
    %210 = vmatpush.xpose.msra.mxu0 0.0
    %211 = vmatpush.xpose.msra.mxu0 0.0
    %212 = vmatpush.xpose.msra.mxu0 0.0
    %213 = vmatpush.xpose.msra.mxu0 0.0
    %214 = vmatpush.xpose.msra.mxu0 0.0
    %215 = vmatpush.xpose.msra.mxu0 0.0
    %216 = vmatpush.xpose.msra.mxu0 0.0
    %217 = vmatpush.xpose.msra.mxu0 %v200
    %218 = vmatmul.f32.gmra.mxu0 %v198
    %v219 = vpop.f32.mrf.mxu0
    %v220 = vadd.f32 0.0, %v219
    %221 = vdwg.mxu0
    %vm222 = vcmask 27648
    %223 = vst.msk [vmem:[#allocation11] sm:$0xf] %vm222, %v220
    // Predicated region
    $region46: #{tpu_custom_call.1} parent=1 // pred_check
      _
    $region47: #{tpu_custom_call.1} parent=1 // pred_check_branch
      %225 = sbr.rel (0) target = $region49
    $region48: #{tpu_custom_call.1} parent=1 // pred_region
      %227 = vsyncadd [#allocation5], 0
      %s229 = sshll.u32 [#allocation11], 4
      %s230 = int_to_ptr.vmem [resolvable:$true] %s229
      %s231 = sshll.u32 %s7, 4
      %s232 = int_to_ptr.hbm [resolvable:$true] %s231
      %234 = dma.vmem_to_hbm [thread:$0]  %s230, 64, %s232, [#allocation5]
    $region49: #{tpu_custom_call.1} parent=1 // pred_fallthru
      _
    // Predicated region
    $region50: #{tpu_custom_call.1} parent=1 // pred_check
      _
    $region51: #{tpu_custom_call.1} parent=1 // pred_check_branch
      %236 = sbr.rel (0) target = $region53
    $region52: #{tpu_custom_call.1} parent=1 // pred_region
      %238 = dma.done [#allocation5], 64
    $region53: #{tpu_custom_call.1} parent=1 // pred_fallthru
      _
    %239 = vsyncpa [#allocation4], 1
    %240 = vsyncpa [#allocation7], 1
    %241 = vsyncpa [#allocation10], 1
    %242 = vsyncpa [#allocation5], 1

</llo_original>
